<compile_context>
chip_gen: v5e
topology: v5e:2x2
jax: 0.10.0
libtpu: 0.0.40
codegen_flags: <defaults>
</compile_context>

<pallas_src>
import functools

import jax
import jax.numpy as jnp
from jax import lax
from jax.experimental import pallas as pl
from jax.experimental.pallas import tpu as pltpu

BN_EPS = 1e-5


def _round_up(x, m):
    return ((x + m - 1) // m) * m


def _bn_relu(h, gamma, beta, inv_n):
    # BatchNorm1d training-mode batch statistics over axis 0 (full batch), per hidden
    # feature, with the affine folded into one scale/shift pair, followed by ReLU.
    mean = jnp.sum(h, axis=0, keepdims=True) * inv_n
    ex2 = jnp.sum(h * h, axis=0, keepdims=True) * inv_n
    var = jnp.maximum(ex2 - mean * mean, 0.0)  # guard against cancellation going negative
    scale = gamma * lax.rsqrt(var + BN_EPS)
    shift = beta - mean * scale
    return jnp.maximum(h * scale + shift, 0.0)


def mlp_kernel_single(x_ref, w1_ref, b1_ref, g_ref, bt_ref, w2_ref, b2_ref, o_ref,
                      *, inv_n):
    # Single-shot fused kernel: the whole hidden dimension fits in one tile, so there is
    # no reduction grid, no accumulator init, and the output is written exactly once.
    bf16, f32 = jnp.bfloat16, jnp.float32
    h = jnp.dot(x_ref[...].astype(bf16), w1_ref[...].astype(bf16),
                preferred_element_type=f32) + b1_ref[...]
    h = _bn_relu(h, g_ref[...], bt_ref[...], inv_n)
    o_ref[...] = (jnp.dot(h.astype(bf16), w2_ref[...].astype(bf16),
                          preferred_element_type=f32) + b2_ref[...])


def mlp_kernel_tiled(x_ref, w1_ref, b1_ref, g_ref, bt_ref, w2_ref, b2_ref, o_ref,
                     *, inv_n):
    # Hidden dimension is a reduction grid axis.  BN statistics are per hidden feature
    # over the FULL batch (batch axis deliberately not tiled), so per-hidden-tile stats
    # are exact.  The VMEM-resident output block is initialised from the first partial
    # matmul (+ b2) -- no separate init/broadcast pass.
    bf16, f32 = jnp.bfloat16, jnp.float32
    k = pl.program_id(0)
    h = jnp.dot(x_ref[...].astype(bf16), w1_ref[...].astype(bf16),
                preferred_element_type=f32) + b1_ref[...]
    h = _bn_relu(h, g_ref[...], bt_ref[...], inv_n)
    partial = jnp.dot(h.astype(bf16), w2_ref[...].astype(bf16),
                      preferred_element_type=f32)

    @pl.when(k == 0)
    def _():
        o_ref[...] = partial + b2_ref[...]

    @pl.when(k > 0)
    def _():
        o_ref[...] += partial


def _as_row(v, dim):
    # Static-shape check: no op is emitted when the caller already passes (1, dim).
    return v.reshape(1, dim) if v.ndim == 1 else v


@functools.partial(jax.jit, static_argnames=("tile_k",))
def mlp_forward(x, w1, b1, gamma, beta, w2, b2, tile_k=512):
    n, nfeat = x.shape
    nhid = w1.shape[1]
    nclass = w2.shape[1]
    f32 = jnp.float32

    b1 = _as_row(b1, nhid)
    gamma = _as_row(gamma, nhid)
    beta = _as_row(beta, nhid)
    b2 = _as_row(b2, nclass)

    inv_n = 1.0 / n

    # Cost estimate from the TRUE (unpadded) problem dims.
    cost = pl.CostEstimate(
        flops=2 * n * nfeat * nhid + 2 * n * nhid * nclass,
        transcendentals=nhid,  # one rsqrt per hidden feature
        bytes_accessed=4 * (x.size + w1.size + w2.size + 3 * nhid + nclass + n * nclass),
    )

    # Clamp the hidden tile to what is actually needed (lane-aligned).
    tile_k = min(tile_k, _round_up(nhid, 128))

    if nhid <= tile_k:
        # ---- single-shot path: no padding, full-dims blocks, no accumulator ----
        kernel = functools.partial(mlp_kernel_single, inv_n=inv_n)
        return pl.pallas_call(
            kernel,
            out_shape=jax.ShapeDtypeStruct((n, nclass), f32),
            grid=(1,),
            in_specs=[
                pl.BlockSpec((n, nfeat), lambda k: (0, 0)),       # x (full array)
                pl.BlockSpec((nfeat, nhid), lambda k: (0, 0)),    # W1
                pl.BlockSpec((1, nhid), lambda k: (0, 0)),        # b1
                pl.BlockSpec((1, nhid), lambda k: (0, 0)),        # gamma
                pl.BlockSpec((1, nhid), lambda k: (0, 0)),        # beta
                pl.BlockSpec((nhid, nclass), lambda k: (0, 0)),   # W2
                pl.BlockSpec((1, nclass), lambda k: (0, 0)),      # b2
            ],
            out_specs=pl.BlockSpec((n, nclass), lambda k: (0, 0)),
            compiler_params=pltpu.CompilerParams(
                dimension_semantics=("arbitrary",)),
            cost_estimate=cost,
        )(x, w1, b1, gamma, beta, w2, b2)

    # ---- tiled-reduction path for large hidden dims ----
    hp = _round_up(nhid, tile_k)
    if hp != nhid:
        # Padded hidden features MUST be zero in gamma/beta/b1 (not ones!) so they stay
        # exactly 0 through BN/ReLU and hit zero W2 rows.
        # TODO(synk): for repeated calls pre-pad the parameters once at init instead.
        w1 = jnp.zeros((nfeat, hp), w1.dtype).at[:, :nhid].set(w1)
        b1 = jnp.zeros((1, hp), b1.dtype).at[:, :nhid].set(b1)
        gamma = jnp.zeros((1, hp), gamma.dtype).at[:, :nhid].set(gamma)
        beta = jnp.zeros((1, hp), beta.dtype).at[:, :nhid].set(beta)
        w2 = jnp.zeros((hp, nclass), w2.dtype).at[:nhid, :].set(w2)

    n_k = hp // tile_k
    kernel = functools.partial(mlp_kernel_tiled, inv_n=inv_n)
    return pl.pallas_call(
        kernel,
        out_shape=jax.ShapeDtypeStruct((n, nclass), f32),
        grid=(n_k,),
        in_specs=[
            pl.BlockSpec((n, nfeat), lambda k: (0, 0)),        # x resident (BN stats)
            pl.BlockSpec((nfeat, tile_k), lambda k: (0, k)),   # W1 hidden tile
            pl.BlockSpec((1, tile_k), lambda k: (0, k)),       # b1
            pl.BlockSpec((1, tile_k), lambda k: (0, k)),       # gamma
            pl.BlockSpec((1, tile_k), lambda k: (0, k)),       # beta
            pl.BlockSpec((tile_k, nclass), lambda k: (k, 0)),  # W2 hidden tile
            pl.BlockSpec((1, nclass), lambda k: (0, 0)),       # b2
        ],
        out_specs=pl.BlockSpec((n, nclass), lambda k: (0, 0)),  # resident accumulator
        compiler_params=pltpu.CompilerParams(
            dimension_semantics=("arbitrary",)),  # hidden axis is a reduction
        cost_estimate=cost,
    )(x, w1, b1, gamma, beta, w2, b2)


def reference_forward(x, w1, b1, gamma, beta, w2, b2):
    # Pure f32 reference with PyTorch training-mode BatchNorm1d semantics.
    h = x @ w1 + b1
    mean = h.mean(axis=0, keepdims=True)
    var = ((h - mean) ** 2).mean(axis=0, keepdims=True)
    h = (h - mean) / jnp.sqrt(var + BN_EPS) * gamma + beta
    h = jnp.maximum(h, 0.0)
    return h @ w2 + b2


if __name__ == "__main__":
    # Small shapes consistent with the module: batch=64, nfeat=32, nhid=32, nclass=8
    N, NFEAT, NHID, NCLASS = 64, 32, 32, 8

    key = jax.random.PRNGKey(0)
    kx, kw1, kb1, kw2, kb2 = jax.random.split(key, 5)

    x = jax.random.normal(kx, (N, NFEAT), dtype=jnp.float32)

    # PyTorch-like Linear init: U(-1/sqrt(fan_in), 1/sqrt(fan_in)); weights stored [in, out]
    lim1 = 1.0 / jnp.sqrt(NFEAT)
    w1 = jax.random.uniform(kw1, (NFEAT, NHID), minval=-lim1, maxval=lim1, dtype=jnp.float32)
    b1 = jax.random.uniform(kb1, (1, NHID), minval=-lim1, maxval=lim1, dtype=jnp.float32)

    lim2 = 1.0 / jnp.sqrt(NHID)
    w2 = jax.random.uniform(kw2, (NHID, NCLASS), minval=-lim2, maxval=lim2, dtype=jnp.float32)
    b2 = jax.random.uniform(kb2, (1, NCLASS), minval=-lim2, maxval=lim2, dtype=jnp.float32)

    # BatchNorm1d affine params (PyTorch default init: ones / zeros)
    gamma = jnp.ones((1, NHID), dtype=jnp.float32)
    beta = jnp.zeros((1, NHID), dtype=jnp.float32)

    out = mlp_forward(x, w1, b1, gamma, beta, w2, b2)
    out = jax.block_until_ready(out)

    ref = reference_forward(x, w1, b1, gamma, beta, w2, b2)
    assert out.shape == (N, NCLASS)
    # Tolerance accounts for bf16 MXU operands (f32 accumulation); observed error is
    # well under 1e-2 at these magnitudes.
    assert jnp.allclose(out, ref, atol=5e-2, rtol=5e-2)

    print("KERNEL_OK")
</pallas_src>

<mosaic_0001>
module attributes {stable_mosaic.version = 11 : i64} {
  func.func @mlp_kernel_single(%arg0: i32, %arg1: memref<64x32xf32, #tpu.memory_space<vmem>>, %arg2: memref<32x32xf32, #tpu.memory_space<vmem>>, %arg3: memref<1x32xf32, #tpu.memory_space<vmem>>, %arg4: memref<1x32xf32, #tpu.memory_space<vmem>>, %arg5: memref<1x32xf32, #tpu.memory_space<vmem>>, %arg6: memref<32x8xf32, #tpu.memory_space<vmem>>, %arg7: memref<1x8xf32, #tpu.memory_space<vmem>>, %arg8: memref<64x8xf32, #tpu.memory_space<vmem>>) attributes {dimension_semantics = [#tpu.dimension_semantics<arbitrary>], iteration_bounds = array<i64: 1>, scalar_prefetch = 0 : i64, scratch_operands = 0 : i64, tpu.core_type = #tpu.core_type<tc>, window_params = [{pipeline_mode = #tpu.pipeline_mode<synchronous>, transform_indices = @transform_0, window_bounds = array<i64: 64, 32>}, {pipeline_mode = #tpu.pipeline_mode<synchronous>, transform_indices = @transform_1, window_bounds = array<i64: 32, 32>}, {pipeline_mode = #tpu.pipeline_mode<synchronous>, transform_indices = @transform_2, window_bounds = array<i64: 1, 32>}, {pipeline_mode = #tpu.pipeline_mode<synchronous>, transform_indices = @transform_3, window_bounds = array<i64: 1, 32>}, {pipeline_mode = #tpu.pipeline_mode<synchronous>, transform_indices = @transform_4, window_bounds = array<i64: 1, 32>}, {pipeline_mode = #tpu.pipeline_mode<synchronous>, transform_indices = @transform_5, window_bounds = array<i64: 32, 8>}, {pipeline_mode = #tpu.pipeline_mode<synchronous>, transform_indices = @transform_6, window_bounds = array<i64: 1, 8>}, {pipeline_mode = #tpu.pipeline_mode<synchronous>, transform_indices = @transform_7, window_bounds = array<i64: 64, 8>}]} {
    %c0 = arith.constant 0 : index
    %c0_0 = arith.constant 0 : index
    %0 = vector.load %arg1[%c0, %c0_0] : memref<64x32xf32, #tpu.memory_space<vmem>>, vector<64x32xf32>
    %1 = arith.truncf %0 : vector<64x32xf32> to vector<64x32xbf16>
    %c0_1 = arith.constant 0 : index
    %c0_2 = arith.constant 0 : index
    %2 = vector.load %arg2[%c0_1, %c0_2] : memref<32x32xf32, #tpu.memory_space<vmem>>, vector<32x32xf32>
    %3 = arith.truncf %2 : vector<32x32xf32> to vector<32x32xbf16>
    %cst = arith.constant dense<0.000000e+00> : vector<64x32xf32>
    %4 = tpu.matmul %1, %3, %cst {dimension_numbers = #tpu.dot_dimension_numbers<[1], [0], [0], [1], [0, 0, 1, 1], [], []>} : vector<64x32xbf16>, vector<32x32xbf16>, vector<64x32xf32> -> vector<64x32xf32>
    %c0_3 = arith.constant 0 : index
    %c0_4 = arith.constant 0 : index
    %5 = vector.load %arg3[%c0_3, %c0_4] : memref<1x32xf32, #tpu.memory_space<vmem>>, vector<1x32xf32>
    %6 = vector.broadcast %5 : vector<1x32xf32> to vector<64x32xf32>
    %7 = arith.addf %4, %6 : vector<64x32xf32>
    %c0_5 = arith.constant 0 : index
    %c0_6 = arith.constant 0 : index
    %8 = vector.load %arg4[%c0_5, %c0_6] : memref<1x32xf32, #tpu.memory_space<vmem>>, vector<1x32xf32>
    %c0_7 = arith.constant 0 : index
    %c0_8 = arith.constant 0 : index
    %9 = vector.load %arg5[%c0_7, %c0_8] : memref<1x32xf32, #tpu.memory_space<vmem>>, vector<1x32xf32>
    %cst_9 = arith.constant dense<0.000000e+00> : vector<32xf32>
    %10 = vector.multi_reduction <add>, %7, %cst_9 [0] : vector<64x32xf32> to vector<32xf32>
    %11 = vector.shape_cast %10 : vector<32xf32> to vector<1x32xf32>
    %cst_10 = arith.constant 1.562500e-02 : f32
    %12 = vector.broadcast %cst_10 : f32 to vector<1x32xf32>
    %13 = arith.mulf %11, %12 : vector<1x32xf32>
    %14 = arith.mulf %7, %7 : vector<64x32xf32>
    %cst_11 = arith.constant dense<0.000000e+00> : vector<32xf32>
    %15 = vector.multi_reduction <add>, %14, %cst_11 [0] : vector<64x32xf32> to vector<32xf32>
    %16 = vector.shape_cast %15 : vector<32xf32> to vector<1x32xf32>
    %cst_12 = arith.constant 1.562500e-02 : f32
    %17 = vector.broadcast %cst_12 : f32 to vector<1x32xf32>
    %18 = arith.mulf %16, %17 : vector<1x32xf32>
    %19 = arith.mulf %13, %13 : vector<1x32xf32>
    %20 = arith.subf %18, %19 : vector<1x32xf32>
    %cst_13 = arith.constant 0.000000e+00 : f32
    %21 = vector.broadcast %cst_13 : f32 to vector<1x32xf32>
    %22 = arith.maximumf %20, %21 : vector<1x32xf32>
    %cst_14 = arith.constant 9.99999974E-6 : f32
    %23 = vector.broadcast %cst_14 : f32 to vector<1x32xf32>
    %24 = arith.addf %22, %23 : vector<1x32xf32>
    %25 = math.rsqrt %24 : vector<1x32xf32>
    %26 = arith.mulf %8, %25 : vector<1x32xf32>
    %27 = arith.mulf %13, %26 : vector<1x32xf32>
    %28 = arith.subf %9, %27 : vector<1x32xf32>
    %29 = vector.broadcast %26 : vector<1x32xf32> to vector<64x32xf32>
    %30 = arith.mulf %7, %29 : vector<64x32xf32>
    %31 = vector.broadcast %28 : vector<1x32xf32> to vector<64x32xf32>
    %32 = arith.addf %30, %31 : vector<64x32xf32>
    %cst_15 = arith.constant 0.000000e+00 : f32
    %33 = vector.broadcast %cst_15 : f32 to vector<64x32xf32>
    %34 = arith.maximumf %32, %33 : vector<64x32xf32>
    %35 = arith.truncf %34 : vector<64x32xf32> to vector<64x32xbf16>
    %c0_16 = arith.constant 0 : index
    %c0_17 = arith.constant 0 : index
    %36 = vector.load %arg6[%c0_16, %c0_17] : memref<32x8xf32, #tpu.memory_space<vmem>>, vector<32x8xf32>
    %37 = arith.truncf %36 : vector<32x8xf32> to vector<32x8xbf16>
    %cst_18 = arith.constant dense<0.000000e+00> : vector<64x8xf32>
    %38 = tpu.matmul %35, %37, %cst_18 {dimension_numbers = #tpu.dot_dimension_numbers<[1], [0], [0], [1], [0, 0, 1, 1], [], []>} : vector<64x32xbf16>, vector<32x8xbf16>, vector<64x8xf32> -> vector<64x8xf32>
    %c0_19 = arith.constant 0 : index
    %c0_20 = arith.constant 0 : index
    %39 = vector.load %arg7[%c0_19, %c0_20] : memref<1x8xf32, #tpu.memory_space<vmem>>, vector<1x8xf32>
    %40 = vector.broadcast %39 : vector<1x8xf32> to vector<64x8xf32>
    %41 = arith.addf %38, %40 : vector<64x8xf32>
    %c0_21 = arith.constant 0 : index
    %c0_22 = arith.constant 0 : index
    %42 = vector.load %arg8[%c0_21, %c0_22] : memref<64x8xf32, #tpu.memory_space<vmem>>, vector<64x8xf32>
    tpu.vector_store %arg8[%c0_21, %c0_22], %41 {strides = array<i32>} : memref<64x8xf32, #tpu.memory_space<vmem>>, vector<64x8xf32>,
    return
  }
  func.func @transform_0(%arg0: i32) -> (i32, i32) {
    %c0_i32 = arith.constant 0 : i32
    %c0_i32_0 = arith.constant 0 : i32
    %c0_i32_1 = arith.constant 0 : i32
    return %c0_i32, %c0_i32_0 : i32, i32
  }
  func.func @transform_1(%arg0: i32) -> (i32, i32) {
    %c0_i32 = arith.constant 0 : i32
    %c0_i32_0 = arith.constant 0 : i32
    %c0_i32_1 = arith.constant 0 : i32
    return %c0_i32, %c0_i32_0 : i32, i32
  }
  func.func @transform_2(%arg0: i32) -> (i32, i32) {
    %c0_i32 = arith.constant 0 : i32
    %c0_i32_0 = arith.constant 0 : i32
    %c0_i32_1 = arith.constant 0 : i32
    return %c0_i32, %c0_i32_0 : i32, i32
  }
  func.func @transform_3(%arg0: i32) -> (i32, i32) {
    %c0_i32 = arith.constant 0 : i32
    %c0_i32_0 = arith.constant 0 : i32
    %c0_i32_1 = arith.constant 0 : i32
    return %c0_i32, %c0_i32_0 : i32, i32
  }
  func.func @transform_4(%arg0: i32) -> (i32, i32) {
    %c0_i32 = arith.constant 0 : i32
    %c0_i32_0 = arith.constant 0 : i32
    %c0_i32_1 = arith.constant 0 : i32
    return %c0_i32, %c0_i32_0 : i32, i32
  }
  func.func @transform_5(%arg0: i32) -> (i32, i32) {
    %c0_i32 = arith.constant 0 : i32
    %c0_i32_0 = arith.constant 0 : i32
    %c0_i32_1 = arith.constant 0 : i32
    return %c0_i32, %c0_i32_0 : i32, i32
  }
  func.func @transform_6(%arg0: i32) -> (i32, i32) {
    %c0_i32 = arith.constant 0 : i32
    %c0_i32_0 = arith.constant 0 : i32
    %c0_i32_1 = arith.constant 0 : i32
    return %c0_i32, %c0_i32_0 : i32, i32
  }
  func.func @transform_7(%arg0: i32) -> (i32, i32) {
    %c0_i32 = arith.constant 0 : i32
    %c0_i32_0 = arith.constant 0 : i32
    %c0_i32_1 = arith.constant 0 : i32
    return %c0_i32, %c0_i32_0 : i32, i32
  }
}

</mosaic_0001>

<llo_original>
// kernel: mlp_forward.1
$region0: #{mlp_forward.1}
  #allocation0 [shape = 'u32[]', space=smem, size = 0x4, offset = 0x4, fixed_abs, tag = 'smem constant byte address 0x4 - core index']
  #allocation1 [shape = 'u32[72,128]{1,0:T(1,128)}', space=vmem, size = 0x9000, scoped, tag = 'internal scratch']
  %s0 = inlined_call_operand.vmem [shape: f32[64,32], index: 0, kind: input, shape index: {}]
  %s1 = inlined_call_operand.vmem [shape: f32[32,32], index: 1, kind: input, shape index: {}]
  %s2 = inlined_call_operand.vmem [shape: f32[1,32], index: 2, kind: input, shape index: {}]
  %s3 = inlined_call_operand.vmem [shape: f32[1,32], index: 3, kind: input, shape index: {}]
  %s4 = inlined_call_operand.vmem [shape: f32[1,32], index: 4, kind: input, shape index: {}]
  %s5 = inlined_call_operand.vmem [shape: f32[32,8], index: 5, kind: input, shape index: {}]
  %s6 = inlined_call_operand.vmem [shape: f32[1,8], index: 6, kind: input, shape index: {}]
  %s7 = inlined_call_operand.vmem [shape: f32[64,8], index: 7, kind: output, shape index: {}]
  %s8 = sld [smem:[#allocation0]]
  $region38: #{mlp_forward.1} parent=0
    _
  %s10 = ssub.s32 1, %s8
  %s11 = scalar_select 0, %s10, %s8
  // Predicated region
  $region2: #{mlp_forward.1} parent=0 // pred_check
    _
  $region3: #{mlp_forward.1} parent=0 // pred_check_branch
    %13 = sbr.rel (0) target = $region5
  $region4: #{mlp_forward.1} parent=0 // pred_region
    _
  $region5: #{mlp_forward.1} parent=0 // pred_fallthru
    _
  // Predicated region
  $region6: #{mlp_forward.1} parent=0 // pred_check
    _
  $region7: #{mlp_forward.1} parent=0 // pred_check_branch
    %15 = sbr.rel (0) target = $region9
  $region8: #{mlp_forward.1} parent=0 // pred_region
    _
  $region9: #{mlp_forward.1} parent=0 // pred_fallthru
    _
  // Predicated region
  $region10: #{mlp_forward.1} parent=0 // pred_check
    _
  $region11: #{mlp_forward.1} parent=0 // pred_check_branch
    %17 = sbr.rel (0) target = $region13
  $region12: #{mlp_forward.1} parent=0 // pred_region
    _
  $region13: #{mlp_forward.1} parent=0 // pred_fallthru
    _
  // Predicated region
  $region14: #{mlp_forward.1} parent=0 // pred_check
    _
  $region15: #{mlp_forward.1} parent=0 // pred_check_branch
    %19 = sbr.rel (0) target = $region17
  $region16: #{mlp_forward.1} parent=0 // pred_region
    _
  $region17: #{mlp_forward.1} parent=0 // pred_fallthru
    _
  // Predicated region
  $region18: #{mlp_forward.1} parent=0 // pred_check
    _
  $region19: #{mlp_forward.1} parent=0 // pred_check_branch
    %21 = sbr.rel (0) target = $region21
  $region20: #{mlp_forward.1} parent=0 // pred_region
    _
  $region21: #{mlp_forward.1} parent=0 // pred_fallthru
    _
  // Predicated region
  $region22: #{mlp_forward.1} parent=0 // pred_check
    _
  $region23: #{mlp_forward.1} parent=0 // pred_check_branch
    %23 = sbr.rel (0) target = $region25
  $region24: #{mlp_forward.1} parent=0 // pred_region
    _
  $region25: #{mlp_forward.1} parent=0 // pred_fallthru
    _
  // Predicated region
  $region26: #{mlp_forward.1} parent=0 // pred_check
    _
  $region27: #{mlp_forward.1} parent=0 // pred_check_branch
    %25 = sbr.rel (0) target = $region29
  $region28: #{mlp_forward.1} parent=0 // pred_region
    _
  $region29: #{mlp_forward.1} parent=0 // pred_fallthru
    _
  %v27 = vld [vmem:[%s0] sm:$0xff]
  %v28 = vld [vmem:[%s0 + $0x8] sm:$0xff]
  %v29 = vld [vmem:[%s0 + $0x10] sm:$0xff]
  %v30 = vld [vmem:[%s0 + $0x18] sm:$0xff]
  %v31 = vld [vmem:[%s0 + $0x20] sm:$0xff]
  %v32 = vld [vmem:[%s0 + $0x28] sm:$0xff]
  %v33 = vld [vmem:[%s0 + $0x30] sm:$0xff]
  %v34 = vld [vmem:[%s0 + $0x38] sm:$0xff]
  %v35 = vpack.c.bf16 %v28, %v27
  %v36 = vpack.c.bf16 %v30, %v29
  %v37 = vpack.c.bf16 %v32, %v31
  %v38 = vpack.c.bf16 %v34, %v33
  %v39 = vld [vmem:[%s1] sm:$0xff]
  %v40 = vld [vmem:[%s1 + $0x8] sm:$0xff]
  %v41 = vld [vmem:[%s1 + $0x10] sm:$0xff]
  %v42 = vld [vmem:[%s1 + $0x18] sm:$0xff]
  %v43 = vpack.c.bf16 %v40, %v39
  %v44 = vpack.c.bf16 %v42, %v41
  %v45 = vld [vmem:[%s2] sm:$0x1]
  %v47 = vperm.slane %v45, 0
  %vm49 = vcmask 261120
  %v51 = vsel %vm49, %v35, 0
  %v54 = vsel %vm49, %v36, 0
  %v57 = vsel %vm49, %v37, 0
  %v60 = vsel %vm49, %v38, 0
  %62 = vmatpush.bf16.msra.mxu0 0
  %63 = vmatpush.bf16.msra.mxu0 0
  %64 = vmatpush.bf16.msra.mxu0 0
  %65 = vmatpush.bf16.msra.mxu0 0
  %66 = vmatpush.bf16.msra.mxu0 0
  %67 = vmatpush.bf16.msra.mxu0 0
  %68 = vmatpush.bf16.msra.mxu0 %v44
  %69 = vmatpush.bf16.msra.mxu0 %v43
  %70 = vmatmul.bf16.gmra.mxu0 %v51
  %v71 = vpop.f32.mrf.mxu0
  %v72 = vadd.f32 %v47, %v71
  %v73 = vpop.f32.mrf.mxu0
  %v74 = vadd.f32 %v47, %v73
  %75 = vmatmul.bf16.gmra.mxu0 %v54
  %v76 = vpop.f32.mrf.mxu0
  %v77 = vadd.f32 %v47, %v76
  %v78 = vpop.f32.mrf.mxu0
  %v79 = vadd.f32 %v47, %v78
  %80 = vmatmul.bf16.gmra.mxu0 %v57
  %v81 = vpop.f32.mrf.mxu0
  %v82 = vadd.f32 %v47, %v81
  %v83 = vpop.f32.mrf.mxu0
  %v84 = vadd.f32 %v47, %v83
  %85 = vmatmul.bf16.gmra.mxu0 %v60
  %v86 = vpop.f32.mrf.mxu0
  %v87 = vadd.f32 %v47, %v86
  %v88 = vpop.f32.mrf.mxu0
  %v89 = vadd.f32 %v47, %v88
  %90 = vdwg.mxu0
  %v91 = vld [vmem:[%s3] sm:$0x1]
  %v92 = vld [vmem:[%s4] sm:$0x1]
  %v93 = vsel %vm49, %v72, 0.0
  %v94 = vsel %vm49, %v74, 0.0
  %v95 = vadd.f32 %v93, %v94
  %v96 = vsel %vm49, %v77, 0.0
  %v97 = vadd.f32 %v95, %v96
  %v98 = vsel %vm49, %v79, 0.0
  %v99 = vadd.f32 %v97, %v98
  %v100 = vsel %vm49, %v82, 0.0
  %v101 = vadd.f32 %v99, %v100
  %v102 = vsel %vm49, %v84, 0.0
  %v103 = vadd.f32 %v101, %v102
  %v104 = vsel %vm49, %v87, 0.0
  %v105 = vadd.f32 %v103, %v104
  %v106 = vsel %vm49, %v89, 0.0
  %v107 = vadd.f32 %v105, %v106
  %v108 = vrot.slane %v107, 4
  %v109 = vadd.f32 %v107, %v108
  %v110 = vrot.slane %v109, 2
  %v111 = vadd.f32 %v109, %v110
  %v112 = vrot.slane %v111, 1
  %v113 = vadd.f32 %v111, %v112
  %v114 = vmul.f32 %v113, 0.015625
  %v115 = vmul.f32 %v72, %v72
  %v116 = vmul.f32 %v74, %v74
  %v117 = vmul.f32 %v77, %v77
  %v118 = vmul.f32 %v79, %v79
  %v119 = vmul.f32 %v82, %v82
  %v120 = vmul.f32 %v84, %v84
  %v121 = vmul.f32 %v87, %v87
  %v122 = vmul.f32 %v89, %v89
  %v123 = vsel %vm49, %v115, 0.0
  %v124 = vsel %vm49, %v116, 0.0
  %v125 = vadd.f32 %v123, %v124
  %v126 = vsel %vm49, %v117, 0.0
  %v127 = vadd.f32 %v125, %v126
  %v128 = vsel %vm49, %v118, 0.0
  %v129 = vadd.f32 %v127, %v128
  %v130 = vsel %vm49, %v119, 0.0
  %v131 = vadd.f32 %v129, %v130
  %v132 = vsel %vm49, %v120, 0.0
  %v133 = vadd.f32 %v131, %v132
  %v134 = vsel %vm49, %v121, 0.0
  %v135 = vadd.f32 %v133, %v134
  %v136 = vsel %vm49, %v122, 0.0
  %v137 = vadd.f32 %v135, %v136
  %v138 = vrot.slane %v137, 4
  %v139 = vadd.f32 %v137, %v138
  %v140 = vrot.slane %v139, 2
  %v141 = vadd.f32 %v139, %v140
  %v142 = vrot.slane %v141, 1
  %v143 = vadd.f32 %v141, %v142
  %v144 = vmul.f32 %v143, 0.015625
  %v145 = vmul.f32 %v114, %v114
  %v146 = vsub.f32 %v144, %v145
  %v147 = vmax.f32 %v146, 0.0
  %v148 = vadd.f32 %v147, 1e-05
  %v149 = vrsqrt.pop %v148
  %v150 = vmul.f32 %v149, %v148
  %v151 = vmul.f32 %v150, %v149
  %v152 = vmul.f32 0.5, %v151
  %v153 = vsub.f32 1.5, %v152
  %v154 = vmul.f32 %v149, %v153
  %vm155 = vweird.f32 %v148
  %vm156 = vweird.f32 %v149
  %vm157 = vmor %vm155, %vm156
  %v158 = vsel %vm157, %v149, %v154
  %v159 = vmul.f32 %v91, %v158
  %v160 = vmul.f32 %v114, %v159
  %v161 = vsub.f32 %v92, %v160
  %v163 = vperm.slane %v159, 0
  %v165 = vmul.f32 %v72, %v163
  %v166 = vmul.f32 %v74, %v163
  %v167 = vmul.f32 %v77, %v163
  %v168 = vmul.f32 %v79, %v163
  %v169 = vmul.f32 %v82, %v163
  %v170 = vmul.f32 %v84, %v163
  %v171 = vmul.f32 %v87, %v163
  %v172 = vmul.f32 %v89, %v163
  %v174 = vperm.slane %v161, 0
  %v176 = vadd.f32 %v165, %v174
  %v177 = vadd.f32 %v166, %v174
  %v178 = vadd.f32 %v167, %v174
  %v179 = vadd.f32 %v168, %v174
  %v180 = vadd.f32 %v169, %v174
  %v181 = vadd.f32 %v170, %v174
  %v182 = vadd.f32 %v171, %v174
  %v183 = vadd.f32 %v172, %v174
  %v184 = vmax.f32 %v176, 0.0
  %v185 = vmax.f32 %v177, 0.0
  %v186 = vmax.f32 %v178, 0.0
  %v187 = vmax.f32 %v179, 0.0
  %v188 = vmax.f32 %v180, 0.0
  %v189 = vmax.f32 %v181, 0.0
  %v190 = vmax.f32 %v182, 0.0
  %v191 = vmax.f32 %v183, 0.0
  %v192 = vpack.c.bf16 %v185, %v184
  %v193 = vpack.c.bf16 %v187, %v186
  %v194 = vpack.c.bf16 %v189, %v188
  %v195 = vpack.c.bf16 %v191, %v190
  %v196 = vld [vmem:[%s5] sm:$0xff]
  %v197 = vld [vmem:[%s5 + $0x8] sm:$0xff]
  %v198 = vld [vmem:[%s5 + $0x10] sm:$0xff]
  %v199 = vld [vmem:[%s5 + $0x18] sm:$0xff]
  %v200 = vpack.c.bf16 %v197, %v196
  %v201 = vpack.c.bf16 %v199, %v198
  %v202 = vld [vmem:[%s6] sm:$0x1]
  %v204 = vperm.slane %v202, 0
  %v207 = vsel %vm49, %v192, 0
  %v210 = vsel %vm49, %v193, 0
  %v213 = vsel %vm49, %v194, 0
  %v216 = vsel %vm49, %v195, 0
  %218 = vmatpush.bf16.msra.mxu0 0
  %219 = vmatpush.bf16.msra.mxu0 0
  %220 = vmatpush.bf16.msra.mxu0 0
  %221 = vmatpush.bf16.msra.mxu0 0
  %222 = vmatpush.bf16.msra.mxu0 0
  %223 = vmatpush.bf16.msra.mxu0 0
  %224 = vmatpush.bf16.msra.mxu0 %v201
  %225 = vmatpush.bf16.msra.mxu0 %v200
  %226 = vmatmul.bf16.gmra.mxu0 %v207
  %v227 = vpop.f32.mrf.mxu0
  %v228 = vadd.f32 %v204, %v227
  %v229 = vpop.f32.mrf.mxu0
  %v230 = vadd.f32 %v204, %v229
  %231 = vmatmul.bf16.gmra.mxu0 %v210
  %v232 = vpop.f32.mrf.mxu0
  %v233 = vadd.f32 %v204, %v232
  %v234 = vpop.f32.mrf.mxu0
  %v235 = vadd.f32 %v204, %v234
  %236 = vmatmul.bf16.gmra.mxu0 %v213
  %v237 = vpop.f32.mrf.mxu0
  %v238 = vadd.f32 %v204, %v237
  %v239 = vpop.f32.mrf.mxu0
  %v240 = vadd.f32 %v204, %v239
  %241 = vmatmul.bf16.gmra.mxu0 %v216
  %v242 = vpop.f32.mrf.mxu0
  %v243 = vadd.f32 %v204, %v242
  %v244 = vpop.f32.mrf.mxu0
  %v245 = vadd.f32 %v204, %v244
  %246 = vdwg.mxu0
  %vm247 = vcmask 64512
  %248 = vst.msk [vmem:[%s7] sm:$0xff] %vm247, %v228
  %249 = vst.msk [vmem:[%s7 + $0x8] sm:$0xff] %vm247, %v230
  %250 = vst.msk [vmem:[%s7 + $0x10] sm:$0xff] %vm247, %v233
  %251 = vst.msk [vmem:[%s7 + $0x18] sm:$0xff] %vm247, %v235
  %252 = vst.msk [vmem:[%s7 + $0x20] sm:$0xff] %vm247, %v238
  %253 = vst.msk [vmem:[%s7 + $0x28] sm:$0xff] %vm247, %v240
  %254 = vst.msk [vmem:[%s7 + $0x30] sm:$0xff] %vm247, %v243
  %255 = vst.msk [vmem:[%s7 + $0x38] sm:$0xff] %vm247, %v245
  // Predicated region
  $region30: #{mlp_forward.1} parent=0 // pred_check
    _
  $region31: #{mlp_forward.1} parent=0 // pred_check_branch
    %257 = sbr.rel (0) target = $region33
  $region32: #{mlp_forward.1} parent=0 // pred_region
    _
  $region33: #{mlp_forward.1} parent=0 // pred_fallthru
    _
  // Predicated region
  $region34: #{mlp_forward.1} parent=0 // pred_check
    _
  $region35: #{mlp_forward.1} parent=0 // pred_check_branch
    %259 = sbr.rel (0) target = $region37
  $region36: #{mlp_forward.1} parent=0 // pred_region
    _
  $region37: #{mlp_forward.1} parent=0 // pred_fallthru
    _

</llo_original>
